<compile_context>
chip_gen: v5e
topology: v5e:2x2
jax: 0.10.0
libtpu: 0.0.40
codegen_flags: <defaults>
</compile_context>

<pallas_src>
import jax
import jax.numpy as jnp
from jax import lax
from jax.experimental import pallas as pl
from jax.experimental.pallas import tpu as pltpu


def _round_up(x, m):
    return (x + m - 1) // m * m


# -----------------------------------------------------------------------------
# Plain-JAX glue: distance, gather, 3-NN interpolation (data-dependent).
# -----------------------------------------------------------------------------
def square_distance(src, dst):
    # src: [B, N, C], dst: [B, M, C] -> [B, N, M]
    dist = -2.0 * jnp.matmul(src, jnp.swapaxes(dst, 1, 2))
    dist = dist + jnp.sum(src ** 2, axis=-1)[:, :, None]
    dist = dist + jnp.sum(dst ** 2, axis=-1)[:, None, :]
    return dist


def index_points(points, idx):
    # points: [B, N, C], idx: [B, ...] -> [B, ..., C]
    B = points.shape[0]
    C = points.shape[-1]
    idx_flat = idx.reshape(B, -1)
    out = jnp.take_along_axis(points, idx_flat[..., None], axis=1)
    return out.reshape(idx.shape + (C,))


def _interpolate_and_concat(xyz1, xyz2, points1, points2):
    """Channel-first inputs ([B,3,N], [B,3,S], [B,D1,N] or None, [B,D2,S]).
    Returns channel-last upsampled features [B, N, Cin]."""
    xyz1_t = jnp.transpose(xyz1, (0, 2, 1))          # [B, N, 3]
    xyz2_t = jnp.transpose(xyz2, (0, 2, 1))          # [B, S, 3]
    points2_t = jnp.transpose(points2, (0, 2, 1))    # [B, S, D2]
    B, N, _ = xyz1_t.shape
    S = xyz2_t.shape[1]

    if S == 1:
        interpolated = jnp.broadcast_to(points2_t, (B, N, points2_t.shape[-1]))
    else:
        dists = square_distance(xyz1_t, xyz2_t)      # [B, N, S]
        neg_top, idx = lax.top_k(-dists, 3)          # 3 nearest (ascending dist)
        d3 = -neg_top
        dist_recip = 1.0 / (d3 + 1e-8)
        norm = jnp.sum(dist_recip, axis=2, keepdims=True)
        weight = dist_recip / norm                   # [B, N, 3]
        gathered = index_points(points2_t, idx)      # [B, N, 3, D2]
        interpolated = jnp.sum(gathered * weight[..., None], axis=2)

    if points1 is not None:
        points1_t = jnp.transpose(points1, (0, 2, 1))
        new_points = jnp.concatenate([points1_t, interpolated], axis=-1)
    else:
        new_points = interpolated
    return new_points                                # [B, N, Cin]


# -----------------------------------------------------------------------------
# Pallas kernels.
# -----------------------------------------------------------------------------
def _make_layer_kernel(apply_input_bn, mask_rows, tile_rows, m_true):
    """Pass for one MLP layer:
       g = relu(x*scale + shift)  (skipped for the first layer)
       h = g_bf16 @ W_bf16        (f32 accumulate on the MXU)
       emit h (bf16) + per-tile partial sum / sum-of-squares of h (f32)."""

    def kernel(x_ref, scale_ref, shift_ref, w_ref, h_ref, sum_ref, ssq_ref):
        g = x_ref[...].astype(jnp.float32)           # [TR, Cin_pad]
        if apply_input_bn:
            g = jnp.maximum(g * scale_ref[...] + shift_ref[...], 0.0)
        if mask_rows:
            # Zero padded rows so they contribute nothing to stats / outputs.
            row0 = pl.program_id(0) * tile_rows
            rid = lax.broadcasted_iota(jnp.int32, g.shape, 0) + row0
            g = jnp.where(rid < m_true, g, 0.0)
        h = jnp.dot(g.astype(jnp.bfloat16), w_ref[...],
                    preferred_element_type=jnp.float32)   # [TR, Cout_pad]
        h_ref[...] = h.astype(h_ref.dtype)
        cout = h.shape[-1]
        # Per-tile partial stats: reduce groups of 8 rows -> [8, Cout_pad]
        # (keeps the block sublane-aligned; tiny cross-tile reduce done in JAX).
        h3 = h.reshape(tile_rows // 8, 8, cout)
        sum_ref[...] = jnp.sum(h3, axis=0)
        ssq_ref[...] = jnp.sum(h3 * h3, axis=0)

    return kernel


def _finalize_kernel(x_ref, scale_ref, shift_ref, o_ref):
    g = x_ref[...].astype(jnp.float32)
    o_ref[...] = jnp.maximum(g * scale_ref[...] + shift_ref[...], 0.0)


def _mlp_layer_pass(x, scale, shift, w, *, tile_rows, apply_input_bn, m_true):
    m_pad, cin_p = x.shape
    cout_p = w.shape[1]
    n_tiles = m_pad // tile_rows
    mask_rows = apply_input_bn and (m_pad > m_true)
    kernel = _make_layer_kernel(apply_input_bn, mask_rows, tile_rows, m_true)

    flops = 2 * m_pad * cin_p * cout_p
    bytes_accessed = (m_pad * cin_p * 2            # x (bf16)
                      + cin_p * cout_p * 2         # weights (bf16)
                      + m_pad * cout_p * 2         # h out (bf16)
                      + 2 * n_tiles * 8 * cout_p * 4)

    h, psum, pssq = pl.pallas_call(
        kernel,
        out_shape=(
            jax.ShapeDtypeStruct((m_pad, cout_p), jnp.bfloat16),
            jax.ShapeDtypeStruct((n_tiles * 8, cout_p), jnp.float32),
            jax.ShapeDtypeStruct((n_tiles * 8, cout_p), jnp.float32),
        ),
        grid_spec=pltpu.PrefetchScalarGridSpec(
            num_scalar_prefetch=0,
            grid=(n_tiles,),
            in_specs=[
                pl.BlockSpec((tile_rows, cin_p), lambda i: (i, 0)),
                pl.BlockSpec((1, cin_p), lambda i: (0, 0)),
                pl.BlockSpec((1, cin_p), lambda i: (0, 0)),
                pl.BlockSpec((cin_p, cout_p), lambda i: (0, 0)),
            ],
            out_specs=(
                pl.BlockSpec((tile_rows, cout_p), lambda i: (i, 0)),
                pl.BlockSpec((8, cout_p), lambda i: (i, 0)),
                pl.BlockSpec((8, cout_p), lambda i: (i, 0)),
            ),
        ),
        compiler_params=pltpu.CompilerParams(
            dimension_semantics=("parallel",),        # shards across v7x's 2 TCs
            vmem_limit_bytes=32 * 1024 * 1024,        # safe on v7x's 64 MiB VMEM
        ),
        cost_estimate=pl.CostEstimate(
            flops=flops, transcendentals=0, bytes_accessed=bytes_accessed),
    )(x, scale, shift, w)
    return h, jnp.sum(psum, axis=0), jnp.sum(pssq, axis=0)


def _mlp_finalize_pass(x, scale, shift, *, tile_rows):
    m_pad, c_p = x.shape
    n_tiles = m_pad // tile_rows
    return pl.pallas_call(
        _finalize_kernel,
        out_shape=jax.ShapeDtypeStruct((m_pad, c_p), jnp.float32),
        grid_spec=pltpu.PrefetchScalarGridSpec(
            num_scalar_prefetch=0,
            grid=(n_tiles,),
            in_specs=[
                pl.BlockSpec((tile_rows, c_p), lambda i: (i, 0)),
                pl.BlockSpec((1, c_p), lambda i: (0, 0)),
                pl.BlockSpec((1, c_p), lambda i: (0, 0)),
            ],
            out_specs=pl.BlockSpec((tile_rows, c_p), lambda i: (i, 0)),
        ),
        compiler_params=pltpu.CompilerParams(
            dimension_semantics=("parallel",),
            vmem_limit_bytes=32 * 1024 * 1024,
        ),
        cost_estimate=pl.CostEstimate(
            flops=2 * m_pad * c_p, transcendentals=0,
            bytes_accessed=m_pad * c_p * (2 + 4)),
    )(x, scale, shift)


# -----------------------------------------------------------------------------
# Module wrapper.
# -----------------------------------------------------------------------------
class PointNetFeaturePropagation:
    """Feature propagation: 3-NN interpolation (JAX glue) + shared MLP
    (Conv1d(1x1) + BatchNorm1d(train-mode batch stats) + ReLU) on Pallas."""

    def __init__(self, in_channel, mlp, key, eps=1e-5):
        self.in_channel = in_channel
        self.mlp = tuple(mlp)
        self.eps = eps
        self.cin_pad = _round_up(in_channel, 128)

        self.w_f32 = []      # unpadded f32 weights (reference / inspection)
        self.w_pad = []      # [Cin_pad, Cout_pad] bf16 (zero-padded)
        self.gamma_pad = []  # [1, Cout_pad] f32 (1 on real channels, 0 on pad)
        self.beta_pad = []   # [1, Cout_pad] f32
        last = in_channel
        for out_channel in mlp:
            key, kw = jax.random.split(key)
            w = jax.random.normal(kw, (last, out_channel), jnp.float32) / \
                jnp.sqrt(jnp.float32(last))
            cin_p = _round_up(last, 128)
            cout_p = _round_up(out_channel, 128)
            w_p = jnp.zeros((cin_p, cout_p), jnp.float32).at[:last, :out_channel].set(w)
            # NOTE: Conv1d bias intentionally omitted — training-mode BatchNorm
            # right after the conv cancels a per-channel bias exactly.
            # TODO(synk): BatchNorm running_mean/var momentum-buffer updates
            # (a training side effect) are not reproduced; forward math matches
            # PyTorch .train() batch-statistics normalization.
            g_p = jnp.zeros((1, cout_p), jnp.float32).at[:, :out_channel].set(1.0)
            b_p = jnp.zeros((1, cout_p), jnp.float32)
            self.w_f32.append(w)
            self.w_pad.append(w_p.astype(jnp.bfloat16))
            self.gamma_pad.append(g_p)
            self.beta_pad.append(b_p)
            last = out_channel

    def __call__(self, xyz1, xyz2, points1, points2):
        # Inputs are channel-first like the PyTorch module.
        new_points = _interpolate_and_concat(xyz1, xyz2, points1, points2)  # [B,N,Cin]
        B, N, cin = new_points.shape
        assert cin == self.in_channel
        M = B * N

        # Row tiling: 512-row tiles when the point count is large (keeps each
        # double-buffered bf16 tile well under 1 MiB even at 1024 channels),
        # otherwise a single sublane-aligned tile.
        if M >= 512:
            tile_rows = 512
            m_pad = _round_up(M, tile_rows)
        else:
            m_pad = _round_up(M, 8)
            tile_rows = m_pad

        x = new_points.reshape(M, cin).astype(jnp.float32)
        x_p = jnp.zeros((m_pad, self.cin_pad), jnp.float32)
        x_p = x_p.at[:M, :cin].set(x).astype(jnp.bfloat16)

        # Dummy scale/shift for the first pass (no input BN on raw features).
        scale = jnp.ones((1, self.cin_pad), jnp.float32)
        shift = jnp.zeros((1, self.cin_pad), jnp.float32)

        h = x_p
        inv_m = 1.0 / float(M)
        for i, (w_p, g_p, b_p) in enumerate(
                zip(self.w_pad, self.gamma_pad, self.beta_pad)):
            h, s, ss = _mlp_layer_pass(
                h, scale, shift, w_p,
                tile_rows=tile_rows, apply_input_bn=(i > 0), m_true=M)
            # Tiny per-channel reductions / BN fold, in f32 (guard cancellation).
            mu = s * inv_m
            var = jnp.maximum(ss * inv_m - mu * mu, 0.0)
            scale = g_p * lax.rsqrt(var + self.eps)        # [1, Cout_pad]
            shift = b_p - mu * scale                       # [1, Cout_pad]

        out = _mlp_finalize_pass(h, scale, shift, tile_rows=tile_rows)

        c_last = self.mlp[-1]
        out = out[:M, :c_last].reshape(B, N, c_last)
        # TODO(synk): the final [B,N,C]->[B,C,N] transpose stays in XLA; a
        # channel-first out_spec would need a batch-aware grid + in-kernel
        # transpose, which is not worthwhile at these sizes.
        return jnp.transpose(out, (0, 2, 1))               # [B, C_last, N]


# -----------------------------------------------------------------------------
# Pure-JAX f32 reference of the same forward (for a sanity check).
# -----------------------------------------------------------------------------
def reference_forward(model, xyz1, xyz2, points1, points2):
    new_points = _interpolate_and_concat(xyz1, xyz2, points1, points2)
    B, N, _ = new_points.shape
    h = new_points.reshape(B * N, -1)
    for w in model.w_f32:
        h = h @ w                                          # conv 1x1 (bias cancels)
        mu = jnp.mean(h, axis=0, keepdims=True)
        var = jnp.mean((h - mu) ** 2, axis=0, keepdims=True)
        h = (h - mu) * lax.rsqrt(var + model.eps)          # gamma=1, beta=0 init
        h = jnp.maximum(h, 0.0)
    c_last = model.mlp[-1]
    return jnp.transpose(h.reshape(B, N, c_last), (0, 2, 1))


if __name__ == "__main__":
    key = jax.random.PRNGKey(0)
    k1, k2, k3, k4, kp = jax.random.split(key, 5)

    B, N, S = 2, 16, 8
    D1, D2 = 4, 6
    xyz1 = jax.random.normal(k1, (B, 3, N), jnp.float32)
    xyz2 = jax.random.normal(k2, (B, 3, S), jnp.float32)
    points1 = jax.random.normal(k3, (B, D1, N), jnp.float32)
    points2 = jax.random.normal(k4, (B, D2, S), jnp.float32)

    fp = PointNetFeaturePropagation(in_channel=D1 + D2, mlp=[16, 32], key=kp)

    out = jax.block_until_ready(fp(xyz1, xyz2, points1, points2))
    assert out.shape == (B, 32, N)
    assert bool(jnp.all(jnp.isfinite(out)))

    ref = jax.block_until_ready(reference_forward(fp, xyz1, xyz2, points1, points2))
    max_err = float(jnp.max(jnp.abs(out - ref)))
    assert max_err < 0.25, f"max abs err {max_err}"

    print("KERNEL_OK")
</pallas_src>

<mosaic_0001>
module attributes {stable_mosaic.version = 11 : i64} {
  func.func @kernel(%arg0: i32, %arg1: memref<32x128xbf16, #tpu.memory_space<vmem>>, %arg2: memref<1x128xf32, #tpu.memory_space<vmem>>, %arg3: memref<1x128xf32, #tpu.memory_space<vmem>>, %arg4: memref<128x128xbf16, #tpu.memory_space<vmem>>, %arg5: memref<32x128xbf16, #tpu.memory_space<vmem>>, %arg6: memref<8x128xf32, #tpu.memory_space<vmem>>, %arg7: memref<8x128xf32, #tpu.memory_space<vmem>>) attributes {dimension_semantics = [#tpu.dimension_semantics<parallel>], iteration_bounds = array<i64: 1>, scalar_prefetch = 0 : i64, scratch_operands = 0 : i64, tpu.core_type = #tpu.core_type<tc>, window_params = [{transform_indices = @transform_0, window_bounds = array<i64: 32, 128>}, {pipeline_mode = #tpu.pipeline_mode<synchronous>, transform_indices = @transform_1, window_bounds = array<i64: 1, 128>}, {pipeline_mode = #tpu.pipeline_mode<synchronous>, transform_indices = @transform_2, window_bounds = array<i64: 1, 128>}, {pipeline_mode = #tpu.pipeline_mode<synchronous>, transform_indices = @transform_3, window_bounds = array<i64: 128, 128>}, {transform_indices = @transform_4, window_bounds = array<i64: 32, 128>}, {transform_indices = @transform_5, window_bounds = array<i64: 8, 128>}, {transform_indices = @transform_6, window_bounds = array<i64: 8, 128>}]} {
    %c0 = arith.constant 0 : index
    %c0_0 = arith.constant 0 : index
    %0 = vector.load %arg1[%c0, %c0_0] : memref<32x128xbf16, #tpu.memory_space<vmem>>, vector<32x128xbf16>
    %1 = arith.extf %0 : vector<32x128xbf16> to vector<32x128xf32>
    %2 = arith.truncf %1 : vector<32x128xf32> to vector<32x128xbf16>
    %c0_1 = arith.constant 0 : index
    %c0_2 = arith.constant 0 : index
    %3 = vector.load %arg4[%c0_1, %c0_2] : memref<128x128xbf16, #tpu.memory_space<vmem>>, vector<128x128xbf16>
    %cst = arith.constant dense<0.000000e+00> : vector<32x128xf32>
    %4 = tpu.matmul %2, %3, %cst {dimension_numbers = #tpu.dot_dimension_numbers<[1], [0], [0], [1], [0, 0, 1, 1], [], []>} : vector<32x128xbf16>, vector<128x128xbf16>, vector<32x128xf32> -> vector<32x128xf32>
    %5 = arith.truncf %4 : vector<32x128xf32> to vector<32x128xbf16>
    %c0_3 = arith.constant 0 : index
    %c0_4 = arith.constant 0 : index
    %6 = vector.load %arg5[%c0_3, %c0_4] : memref<32x128xbf16, #tpu.memory_space<vmem>>, vector<32x128xbf16>
    tpu.vector_store %arg5[%c0_3, %c0_4], %5 {strides = array<i32>} : memref<32x128xbf16, #tpu.memory_space<vmem>>, vector<32x128xbf16>,
    %7 = vector.shape_cast %4 : vector<32x128xf32> to vector<4x8x128xf32>
    %cst_5 = arith.constant dense<0.000000e+00> : vector<8x128xf32>
    %8 = vector.multi_reduction <add>, %7, %cst_5 [0] : vector<4x8x128xf32> to vector<8x128xf32>
    %c0_6 = arith.constant 0 : index
    %c0_7 = arith.constant 0 : index
    %9 = vector.load %arg6[%c0_6, %c0_7] : memref<8x128xf32, #tpu.memory_space<vmem>>, vector<8x128xf32>
    tpu.vector_store %arg6[%c0_6, %c0_7], %8 {strides = array<i32>} : memref<8x128xf32, #tpu.memory_space<vmem>>, vector<8x128xf32>,
    %10 = arith.mulf %7, %7 : vector<4x8x128xf32>
    %cst_8 = arith.constant dense<0.000000e+00> : vector<8x128xf32>
    %11 = vector.multi_reduction <add>, %10, %cst_8 [0] : vector<4x8x128xf32> to vector<8x128xf32>
    %c0_9 = arith.constant 0 : index
    %c0_10 = arith.constant 0 : index
    %12 = vector.load %arg7[%c0_9, %c0_10] : memref<8x128xf32, #tpu.memory_space<vmem>>, vector<8x128xf32>
    tpu.vector_store %arg7[%c0_9, %c0_10], %11 {strides = array<i32>} : memref<8x128xf32, #tpu.memory_space<vmem>>, vector<8x128xf32>,
    return
  }
  func.func @transform_0(%arg0: i32) -> (i32, i32) {
    %c0_i32 = arith.constant 0 : i32
    %c0_i32_0 = arith.constant 0 : i32
    return %arg0, %c0_i32 : i32, i32
  }
  func.func @transform_1(%arg0: i32) -> (i32, i32) {
    %c0_i32 = arith.constant 0 : i32
    %c0_i32_0 = arith.constant 0 : i32
    %c0_i32_1 = arith.constant 0 : i32
    return %c0_i32, %c0_i32_0 : i32, i32
  }
  func.func @transform_2(%arg0: i32) -> (i32, i32) {
    %c0_i32 = arith.constant 0 : i32
    %c0_i32_0 = arith.constant 0 : i32
    %c0_i32_1 = arith.constant 0 : i32
    return %c0_i32, %c0_i32_0 : i32, i32
  }
  func.func @transform_3(%arg0: i32) -> (i32, i32) {
    %c0_i32 = arith.constant 0 : i32
    %c0_i32_0 = arith.constant 0 : i32
    %c0_i32_1 = arith.constant 0 : i32
    return %c0_i32, %c0_i32_0 : i32, i32
  }
  func.func @transform_4(%arg0: i32) -> (i32, i32) {
    %c0_i32 = arith.constant 0 : i32
    %c0_i32_0 = arith.constant 0 : i32
    return %arg0, %c0_i32 : i32, i32
  }
  func.func @transform_5(%arg0: i32) -> (i32, i32) {
    %c0_i32 = arith.constant 0 : i32
    %c0_i32_0 = arith.constant 0 : i32
    return %arg0, %c0_i32 : i32, i32
  }
  func.func @transform_6(%arg0: i32) -> (i32, i32) {
    %c0_i32 = arith.constant 0 : i32
    %c0_i32_0 = arith.constant 0 : i32
    return %arg0, %c0_i32 : i32, i32
  }
}

</mosaic_0001>

<llo_original>
// kernel: tpu_custom_call.1
$region0: #{tpu_custom_call.1}
  #allocation0 [shape = 'u32[]', space=smem, size = 0x4, offset = 0x4, fixed_abs, tag = 'smem constant byte address 0x4 - core index']
  #allocation1 [shape = 'u32[72,128]{1,0:T(1,128)}', space=vmem, size = 0x9000, scoped, tag = 'internal scratch']
  %s0 = inlined_call_operand.hbm [shape: bf16[32,128], index: 0, kind: input, shape index: {}]
  %s1 = inlined_call_operand.hbm [shape: f32[1,128], index: 1, kind: input, shape index: {}]
  %s2 = inlined_call_operand.vmem [shape: f32[1,128], index: 2, kind: input, shape index: {}]
  %s3 = inlined_call_operand.hbm [shape: bf16[128,128], index: 3, kind: input, shape index: {}]
  %s4 = inlined_call_operand.hbm [shape: bf16[32,128], index: 4, kind: output, shape index: {0}]
  %s5 = inlined_call_operand.hbm [shape: f32[8,128], index: 5, kind: output, shape index: {1}]
  %s6 = inlined_call_operand.hbm [shape: f32[8,128], index: 6, kind: output, shape index: {2}]
  %7 = xla_tuple %s4, %s5, %s6
  %s8 = sld [smem:[#allocation0]]
  $region54: #{tpu_custom_call.1} parent=0
    _
  %s10 = ssub.s32 1, %s8
  %s11 = scalar_select 0, %s10, %s8
  $region1: #{tpu_custom_call.1} parent=0
    #allocation2 [shape = 'u8[8192]{0}', space=vmem, size = 0x2000, scoped, tag = 'input window, operand 0, single buffered']
    #allocation3 [shape = 's32[1]{0}', space=sflag, size = 0x4, scoped, tag = 'scoped memory for tpu_custom_call.1']
    #allocation4 [shape = 's32[1]{0}', space=sflag, size = 0x4, scoped, tag = 'scoped memory for tpu_custom_call.1']
    #allocation5 [shape = 'u8[512]{0}', space=vmem, size = 0x400, scoped, tag = 'input window, operand 1, single buffered']
    #allocation6 [shape = 's32[1]{0}', space=sflag, size = 0x4, scoped, tag = 'scoped memory for tpu_custom_call.1']
    #allocation7 [shape = 'u8[32768]{0}', space=vmem, size = 0x8000, scoped, tag = 'input window, operand 3, single buffered']
    #allocation8 [shape = 'u8[8192]{0}', space=vmem, size = 0x2000, scoped, tag = 'output window, operand 0, single buffered']
    #allocation9 [shape = 'u8[4096]{0}', space=vmem, size = 0x1000, scoped, tag = 'output window, operand 1, single buffered']
    #allocation10 [shape = 's32[1]{0}', space=sflag, size = 0x4, scoped, tag = 'scoped memory for tpu_custom_call.1']
    #allocation11 [shape = 'u8[4096]{0}', space=vmem, size = 0x1000, scoped, tag = 'output window, operand 2, single buffered']
    %12 = vsyncpa [#allocation3], 0
    %13 = vsyncpa [#allocation6], 0
    %14 = vsyncpa [#allocation4], 0
    %15 = vsyncpa [#allocation10], 0
    // Predicated region
    $region2: #{tpu_custom_call.1} parent=1 // pred_check
      _
    $region3: #{tpu_custom_call.1} parent=1 // pred_check_branch
      %17 = sbr.rel (0) target = $region5
    $region4: #{tpu_custom_call.1} parent=1 // pred_region
      %19 = vsyncadd [#allocation3], 0
      %s20 = sshll.u32 %s0, 4
      %s21 = int_to_ptr.hbm [resolvable:$true] %s20
      %s22 = sshll.u32 [#allocation2], 4
      %s23 = int_to_ptr.vmem [resolvable:$true] %s22
      %28 = dma.hbm_to_vmem [thread:$0]  %s21, 256, %s23, [#allocation3], 64, 64, 4
    $region5: #{tpu_custom_call.1} parent=1 // pred_fallthru
      _
    // Predicated region
    $region6: #{tpu_custom_call.1} parent=1 // pred_check
      _
    $region7: #{tpu_custom_call.1} parent=1 // pred_check_branch
      %30 = sbr.rel (0) target = $region9
    $region8: #{tpu_custom_call.1} parent=1 // pred_region
      %32 = vsyncadd [#allocation6], 0
      %s34 = sshll.u32 %s1, 4
      %s35 = int_to_ptr.hbm [resolvable:$true] %s34
      %s36 = sshll.u32 [#allocation5], 4
      %s37 = int_to_ptr.vmem [resolvable:$true] %s36
      %39 = dma.hbm_to_vmem [thread:$0]  %s35, 16, %s37, [#allocation6]
    $region9: #{tpu_custom_call.1} parent=1 // pred_fallthru
      _
    // Predicated region
    $region10: #{tpu_custom_call.1} parent=1 // pred_check
      _
    $region11: #{tpu_custom_call.1} parent=1 // pred_check_branch
      %41 = sbr.rel (0) target = $region13
    $region12: #{tpu_custom_call.1} parent=1 // pred_region
      _
    $region13: #{tpu_custom_call.1} parent=1 // pred_fallthru
      _
    // Predicated region
    $region14: #{tpu_custom_call.1} parent=1 // pred_check
      _
    $region15: #{tpu_custom_call.1} parent=1 // pred_check_branch
      %43 = sbr.rel (0) target = $region17
    $region16: #{tpu_custom_call.1} parent=1 // pred_region
      %45 = vsyncadd [#allocation6], 0
      %s46 = sshll.u32 %s3, 4
      %s47 = int_to_ptr.hbm [resolvable:$true] %s46
      %s48 = sshll.u32 [#allocation7], 4
      %s49 = int_to_ptr.vmem [resolvable:$true] %s48
      %54 = dma.hbm_to_vmem [thread:$0]  %s47, 1024, %s49, [#allocation6], 64, 64, 4
    $region17: #{tpu_custom_call.1} parent=1 // pred_fallthru
      _
    // Predicated region
    $region18: #{tpu_custom_call.1} parent=1 // pred_check
      _
    $region19: #{tpu_custom_call.1} parent=1 // pred_check_branch
      %56 = sbr.rel (0) target = $region21
    $region20: #{tpu_custom_call.1} parent=1 // pred_region
      %58 = dma.done [#allocation3], 256
    $region21: #{tpu_custom_call.1} parent=1 // pred_fallthru
      _
    // Predicated region
    $region22: #{tpu_custom_call.1} parent=1 // pred_check
      _
    $region23: #{tpu_custom_call.1} parent=1 // pred_check_branch
      %60 = sbr.rel (0) target = $region25
    $region24: #{tpu_custom_call.1} parent=1 // pred_region
      %62 = dma.done [#allocation6], 16
    $region25: #{tpu_custom_call.1} parent=1 // pred_fallthru
      _
    // Predicated region
    $region26: #{tpu_custom_call.1} parent=1 // pred_check
      _
    $region27: #{tpu_custom_call.1} parent=1 // pred_check_branch
      %64 = sbr.rel (0) target = $region29
    $region28: #{tpu_custom_call.1} parent=1 // pred_region
      %66 = dma.done [#allocation6], 1024
    $region29: #{tpu_custom_call.1} parent=1 // pred_fallthru
      _
    %v67 = vld [vmem:[#allocation2] sm:$0xf]
    %v68 = vld [vmem:[#allocation2 + $0x4] sm:$0xf]
    %v69 = vld [vmem:[#allocation2 + $0x8] sm:$0xf]
    %v70 = vld [vmem:[#allocation2 + $0xc] sm:$0xf]
    %v71 = vld [vmem:[#allocation7] sm:$0xf]
    %v72 = vld [vmem:[#allocation7 + $0x4] sm:$0xf]
    %v73 = vld [vmem:[#allocation7 + $0x8] sm:$0xf]
    %v74 = vld [vmem:[#allocation7 + $0xc] sm:$0xf]
    %v75 = vld [vmem:[#allocation7 + $0x10] sm:$0xf]
    %v76 = vld [vmem:[#allocation7 + $0x14] sm:$0xf]
    %v77 = vld [vmem:[#allocation7 + $0x18] sm:$0xf]
    %v78 = vld [vmem:[#allocation7 + $0x1c] sm:$0xf]
    %v79 = vld [vmem:[#allocation7 + $0x20] sm:$0xf]
    %v80 = vld [vmem:[#allocation7 + $0x24] sm:$0xf]
    %v81 = vld [vmem:[#allocation7 + $0x28] sm:$0xf]
    %v82 = vld [vmem:[#allocation7 + $0x2c] sm:$0xf]
    %v83 = vld [vmem:[#allocation7 + $0x30] sm:$0xf]
    %v84 = vld [vmem:[#allocation7 + $0x34] sm:$0xf]
    %v85 = vld [vmem:[#allocation7 + $0x38] sm:$0xf]
    %v86 = vld [vmem:[#allocation7 + $0x3c] sm:$0xf]
    %v91 = vunpack.c.l.b16 %v67
    %v92 = vunpack.c.l.b16 %v68
    %v93 = vunpack.c.l.b16 %v69
    %v94 = vunpack.c.l.b16 %v70
    %v95 = vpack.c.b16 %v92, %v91
    %v96 = vpack.c.b16 %v94, %v93
    %v115 = vunpack.c.l.b16 %v71
    %v116 = vunpack.c.l.b16 %v72
    %v117 = vunpack.c.l.b16 %v73
    %v118 = vunpack.c.l.b16 %v74
    %v119 = vunpack.c.l.b16 %v75
    %v120 = vunpack.c.l.b16 %v76
    %v121 = vunpack.c.l.b16 %v77
    %v122 = vunpack.c.l.b16 %v78
    %v123 = vunpack.c.l.b16 %v79
    %v124 = vunpack.c.l.b16 %v80
    %v125 = vunpack.c.l.b16 %v81
    %v126 = vunpack.c.l.b16 %v82
    %v127 = vunpack.c.l.b16 %v83
    %v128 = vunpack.c.l.b16 %v84
    %v129 = vunpack.c.l.b16 %v85
    %v130 = vunpack.c.l.b16 %v86
    %v131 = vpack.c.b16 %v116, %v115
    %v132 = vpack.c.b16 %v118, %v117
    %v133 = vpack.c.b16 %v120, %v119
    %v134 = vpack.c.b16 %v122, %v121
    %v135 = vpack.c.b16 %v124, %v123
    %v136 = vpack.c.b16 %v126, %v125
    %v137 = vpack.c.b16 %v128, %v127
    %v138 = vpack.c.b16 %v130, %v129
    %147 = vmatpush.bf16.msra.mxu0 %v138
    %148 = vmatpush.bf16.msra.mxu0 %v137
    %149 = vmatpush.bf16.msra.mxu0 %v136
    %150 = vmatpush.bf16.msra.mxu0 %v135
    %151 = vmatpush.bf16.msra.mxu0 %v134
    %152 = vmatpush.bf16.msra.mxu0 %v133
    %153 = vmatpush.bf16.msra.mxu0 %v132
    %154 = vmatpush.bf16.msra.mxu0 %v131
    %155 = vmatmul.bf16.gmra.mxu0 %v95
    %v156 = vpop.f32.mrf.mxu0
    %v157 = vadd.f32 0.0, %v156
    %v158 = vpop.f32.mrf.mxu0
    %v159 = vadd.f32 0.0, %v158
    %160 = vmatmul.bf16.gmra.mxu0 %v96
    %v161 = vpop.f32.mrf.mxu0
    %v162 = vadd.f32 0.0, %v161
    %v163 = vpop.f32.mrf.mxu0
    %v164 = vadd.f32 0.0, %v163
    %165 = vdwg.mxu0
    %v166 = vpack.c.bf16 %v157, %v157
    %v167 = vpack.c.bf16 %v159, %v159
    %v168 = vpack.c.bf16 %v162, %v162
    %v169 = vpack.c.bf16 %v164, %v164
    %170 = vst [vmem:[#allocation8] sm:$0xf] %v166
    %171 = vst [vmem:[#allocation8 + $0x4] sm:$0xf] %v167
    %172 = vst [vmem:[#allocation8 + $0x8] sm:$0xf] %v168
    %173 = vst [vmem:[#allocation8 + $0xc] sm:$0xf] %v169
    %v174 = vadd.f32 %v157, %v159
    %v175 = vadd.f32 %v174, %v162
    %v176 = vadd.f32 %v175, %v164
    %177 = vst [vmem:[#allocation9] sm:$0xff] %v176
    %v178 = vmul.f32 %v157, %v157
    %v179 = vmul.f32 %v159, %v159
    %v180 = vmul.f32 %v162, %v162
    %v181 = vmul.f32 %v164, %v164
    %v182 = vadd.f32 %v178, %v179
    %v183 = vadd.f32 %v182, %v180
    %v184 = vadd.f32 %v183, %v181
    %185 = vst [vmem:[#allocation11] sm:$0xff] %v184
    // Predicated region
    $region30: #{tpu_custom_call.1} parent=1 // pred_check
      _
    $region31: #{tpu_custom_call.1} parent=1 // pred_check_branch
      %187 = sbr.rel (0) target = $region33
    $region32: #{tpu_custom_call.1} parent=1 // pred_region
      %189 = vsyncadd [#allocation4], 0
      %s190 = sshll.u32 [#allocation8], 4
      %s191 = int_to_ptr.vmem [resolvable:$true] %s190
      %s192 = sshll.u32 %s4, 4
      %s193 = int_to_ptr.hbm [resolvable:$true] %s192
      %198 = dma.vmem_to_hbm [thread:$0]  %s191, 256, %s193, [#allocation4], 64, 64, 4
    $region33: #{tpu_custom_call.1} parent=1 // pred_fallthru
      _
    // Predicated region
    $region34: #{tpu_custom_call.1} parent=1 // pred_check
      _
    $region35: #{tpu_custom_call.1} parent=1 // pred_check_branch
      %200 = sbr.rel (0) target = $region37
    $region36: #{tpu_custom_call.1} parent=1 // pred_region
      %202 = vsyncadd [#allocation10], 0
      %s204 = sshll.u32 [#allocation9], 4
      %s205 = int_to_ptr.vmem [resolvable:$true] %s204
      %s206 = sshll.u32 %s5, 4
      %s207 = int_to_ptr.hbm [resolvable:$true] %s206
      %209 = dma.vmem_to_hbm [thread:$0]  %s205, 128, %s207, [#allocation10]
    $region37: #{tpu_custom_call.1} parent=1 // pred_fallthru
      _
    // Predicated region
    $region38: #{tpu_custom_call.1} parent=1 // pred_check
      _
    $region39: #{tpu_custom_call.1} parent=1 // pred_check_branch
      %211 = sbr.rel (0) target = $region41
    $region40: #{tpu_custom_call.1} parent=1 // pred_region
      %213 = vsyncadd [#allocation10], 0
      %s215 = sshll.u32 [#allocation11], 4
      %s216 = int_to_ptr.vmem [resolvable:$true] %s215
      %s217 = sshll.u32 %s6, 4
      %s218 = int_to_ptr.hbm [resolvable:$true] %s217
      %220 = dma.vmem_to_hbm [thread:$0]  %s216, 128, %s218, [#allocation10]
    $region41: #{tpu_custom_call.1} parent=1 // pred_fallthru
      _
    // Predicated region
    $region42: #{tpu_custom_call.1} parent=1 // pred_check
      _
    $region43: #{tpu_custom_call.1} parent=1 // pred_check_branch
      %222 = sbr.rel (0) target = $region45
    $region44: #{tpu_custom_call.1} parent=1 // pred_region
      %224 = dma.done [#allocation4], 256
    $region45: #{tpu_custom_call.1} parent=1 // pred_fallthru
      _
    // Predicated region
    $region46: #{tpu_custom_call.1} parent=1 // pred_check
      _
    $region47: #{tpu_custom_call.1} parent=1 // pred_check_branch
      %226 = sbr.rel (0) target = $region49
    $region48: #{tpu_custom_call.1} parent=1 // pred_region
      %228 = dma.done [#allocation10], 128
    $region49: #{tpu_custom_call.1} parent=1 // pred_fallthru
      _
    // Predicated region
    $region50: #{tpu_custom_call.1} parent=1 // pred_check
      _
    $region51: #{tpu_custom_call.1} parent=1 // pred_check_branch
      %230 = sbr.rel (0) target = $region53
    $region52: #{tpu_custom_call.1} parent=1 // pred_region
      %232 = dma.done [#allocation10], 128
    $region53: #{tpu_custom_call.1} parent=1 // pred_fallthru
      _
    %233 = vsyncpa [#allocation3], 1
    %234 = vsyncpa [#allocation6], 1
    %235 = vsyncpa [#allocation4], 1
    %236 = vsyncpa [#allocation10], 1

</llo_original>
